<compile_context>
chip_gen: v7x
topology: tpu7x:2x2x1
jax: 0.10.0
libtpu: 0.0.40
codegen_flags: <defaults>
</compile_context>

<pallas_src>
import functools

import jax
import jax.numpy as jnp
from jax.experimental import pallas as pl
from jax.experimental.pallas import tpu as pltpu


def _round_up(x, m):
    return (x + m - 1) // m * m


def _pick_row_tile(m_rows, hidden, x_itemsize, out_itemsize, w_itemsize):
    """Biggest VMEM-budgeted row tile; lane-padding aware, dtype-aligned."""
    # Sublane packing: f32 -> 8 rows/vreg, bf16 -> 16, int8/fp8 -> 32.
    sublane = 8 if x_itemsize >= 4 else (16 if x_itemsize == 2 else 32)
    # Per-row bytes of the double-buffered streamed blocks.  The (tm,1) int32
    # label block and the (tm,NL) logits block both lane-pad to 128 lanes.
    per_row = (2 * hidden * x_itemsize      # x tile (x2 buffers)
               + 2 * 128 * out_itemsize     # logits tile (NL lane-padded)
               + 2 * 128 * 4)               # labels tile (lane-padded i32)
    # Grid-invariant W (H, NL->128 lanes) and bias still get two buffers each.
    fixed = 2 * _round_up(hidden, 8) * 128 * w_itemsize + 64 * 1024
    budget = max(sublane * per_row, 36 * 1024 * 1024 - fixed)
    tm = max(sublane, (budget // per_row) // sublane * sublane)
    tm = int(min(tm, 4096))
    if m_rows <= tm:
        # One tile: use the exact row count so the block equals the full array
        # (no (8,128) alignment requirement, no OOB tail at all).
        return m_rows
    return tm


# ----------------------------------------------------------------------------
# Fused kernel: row-tile linear projection + cross-entropy epilogue.
# ----------------------------------------------------------------------------
def _make_loss_kernel(m_rows):
    def kernel(x_ref, w_ref, b_ref, lab_ref, logits_ref, stats_ref):
        # x: (tm, H), w: (H, NL), b: (1, NL) f32, lab: (tm, 1) i32,
        # logits: (tm, NL), stats: (8, 128) per-tile partial slab.
        tm = x_ref.shape[0]
        nl = w_ref.shape[1]

        logits = jnp.dot(x_ref[...], w_ref[...],
                         preferred_element_type=jnp.float32) + b_ref[...]
        logits_ref[...] = logits.astype(logits_ref.dtype)

        # Validity: in-bounds row (tail of the last tile reads undefined data
        # beyond M) AND label inside [0, NL) (covers torch ignore_index=-100).
        lab = lab_ref[...]                                       # (tm, 1) i32
        row = (pl.program_id(0) * tm
               + jax.lax.broadcasted_iota(jnp.int32, (tm, 1), 0))
        valid = jnp.logical_and(row < m_rows,
                                jnp.logical_and(lab >= 0, lab < nl))

        m = jnp.max(logits, axis=-1, keepdims=True)
        lse = jnp.log(jnp.sum(jnp.exp(logits - m), axis=-1, keepdims=True)) + m
        cols = jax.lax.broadcasted_iota(jnp.int32, logits.shape, 1)
        picked = jnp.sum(jnp.where(cols == lab, logits, 0.0),
                         axis=-1, keepdims=True)
        # jnp.where (not multiply-by-mask) so garbage/Inf/NaN tail logits are
        # excluded before the sum and cannot corrupt the loss.
        nll_sum = jnp.sum(jnp.where(valid, lse - picked, 0.0))
        cnt_sum = jnp.sum(valid.astype(jnp.float32))

        # Pack both per-tile partials into one lane-dense (8,128) slab:
        # [0,0] = sum of nll, [0,1] = valid-token count, rest zero.
        r = jax.lax.broadcasted_iota(jnp.int32, stats_ref.shape, 0)
        c = jax.lax.broadcasted_iota(jnp.int32, stats_ref.shape, 1)
        stats_ref[...] = jnp.where(
            jnp.logical_and(r == 0, c == 0), nll_sum,
            jnp.where(jnp.logical_and(r == 0, c == 1), cnt_sum, 0.0))
    return kernel


def _logits_kernel(x_ref, w_ref, b_ref, logits_ref):
    logits_ref[...] = (jnp.dot(x_ref[...], w_ref[...],
                               preferred_element_type=jnp.float32)
                       + b_ref[...]).astype(logits_ref.dtype)


_COMPILER_PARAMS = pltpu.CompilerParams(
    dimension_semantics=("parallel",),
    vmem_limit_bytes=48 * 1024 * 1024,   # covers the 36 MiB tile budget,
)                                        # still < v7x's 64 MiB physical VMEM.


# ----------------------------------------------------------------------------
# Wrappers around pallas_call.
# ----------------------------------------------------------------------------
@functools.partial(jax.jit, static_argnames=("tile_rows",))
def _fused_forward(x2d, labels_flat, w, b, tile_rows=None):
    M, H = x2d.shape
    NL = w.shape[1]
    out_dtype = jnp.result_type(x2d.dtype, w.dtype)
    if tile_rows is None:
        tm = _pick_row_tile(M, H, x2d.dtype.itemsize,
                            jnp.dtype(out_dtype).itemsize,
                            jnp.dtype(w.dtype).itemsize)
    else:
        tm = int(tile_rows)
    grid = pl.cdiv(M, tm)

    lab2d = labels_flat.reshape(M, 1).astype(jnp.int32)
    b2d = b.astype(jnp.float32).reshape(1, NL)

    # TODO(synk): if num_labels can exceed ~128, add an N grid axis and tile
    # W / logits along NL; for small label sets the full block is optimal.
    logits, stats = pl.pallas_call(
        _make_loss_kernel(M),
        out_shape=(
            jax.ShapeDtypeStruct((M, NL), out_dtype),
            jax.ShapeDtypeStruct((grid * 8, 128), jnp.float32),
        ),
        grid_spec=pltpu.PrefetchScalarGridSpec(
            num_scalar_prefetch=0,
            grid=(grid,),
            in_specs=[
                pl.BlockSpec((tm, H), lambda i: (i, 0)),
                pl.BlockSpec((H, NL), lambda i: (0, 0)),   # grid-invariant W
                pl.BlockSpec((1, NL), lambda i: (0, 0)),   # grid-invariant b
                pl.BlockSpec((tm, 1), lambda i: (i, 0)),
            ],
            out_specs=[
                pl.BlockSpec((tm, NL), lambda i: (i, 0)),
                pl.BlockSpec((8, 128), lambda i: (i, 0)),
            ],
        ),
        compiler_params=_COMPILER_PARAMS,
    )(x2d, w, b2d, lab2d)

    part = stats.reshape(grid, 8, 128)
    # Mean over valid tokens; 0/0 -> NaN exactly like torch CrossEntropyLoss.
    loss = jnp.sum(part[:, 0, 0]) / jnp.sum(part[:, 0, 1])
    return logits, loss


@functools.partial(jax.jit, static_argnames=("tile_rows",))
def _logits_forward(x2d, w, b, tile_rows=None):
    M, H = x2d.shape
    NL = w.shape[1]
    out_dtype = jnp.result_type(x2d.dtype, w.dtype)
    if tile_rows is None:
        tm = _pick_row_tile(M, H, x2d.dtype.itemsize,
                            jnp.dtype(out_dtype).itemsize,
                            jnp.dtype(w.dtype).itemsize)
    else:
        tm = int(tile_rows)
    grid = pl.cdiv(M, tm)
    b2d = b.astype(jnp.float32).reshape(1, NL)

    logits = pl.pallas_call(
        _logits_kernel,
        out_shape=jax.ShapeDtypeStruct((M, NL), out_dtype),
        grid_spec=pltpu.PrefetchScalarGridSpec(
            num_scalar_prefetch=0,
            grid=(grid,),
            in_specs=[
                pl.BlockSpec((tm, H), lambda i: (i, 0)),
                pl.BlockSpec((H, NL), lambda i: (0, 0)),
                pl.BlockSpec((1, NL), lambda i: (0, 0)),
            ],
            out_specs=pl.BlockSpec((tm, NL), lambda i: (i, 0)),
        ),
        compiler_params=_COMPILER_PARAMS,
    )(x2d, w, b2d)
    return logits


# ----------------------------------------------------------------------------
# TokenClassificationDecoder forward (mirrors the PyTorch module).
# ----------------------------------------------------------------------------
def token_classification_decoder_forward(sequence_output, attention_mask,
                                          labels, w, b, tile_rows=None):
    # TODO(synk): nn.Dropout(0.1) is stochastic only in training; here it is
    # the eval-mode identity (deterministic forward).
    B, S, H = sequence_output.shape
    x2d = sequence_output.reshape(B * S, H)

    if labels is None:
        logits2d = _logits_forward(x2d, w, b, tile_rows=tile_rows)
        return logits2d.reshape(B, S, -1), None

    lab = labels.reshape(-1).astype(jnp.int32)
    if attention_mask is not None:
        lab = jnp.where(attention_mask.reshape(-1) == 1, lab, jnp.int32(-100))
    logits2d, loss = _fused_forward(x2d, lab, w, b, tile_rows=tile_rows)
    return logits2d.reshape(B, S, -1), loss


# ----------------------------------------------------------------------------
# Pure-JAX reference for verification.
# ----------------------------------------------------------------------------
def _reference(sequence_output, attention_mask, labels, w, b):
    NL = w.shape[1]
    logits = jnp.einsum("bsh,hn->bsn", sequence_output, w) + b
    if labels is None:
        return logits, None
    lab = labels.reshape(-1)
    if attention_mask is not None:
        lab = jnp.where(attention_mask.reshape(-1) == 1, lab, -100)
    lg = logits.reshape(-1, NL).astype(jnp.float32)
    valid = jnp.logical_and(lab >= 0, lab < NL).astype(jnp.float32)
    lab_c = jnp.clip(lab, 0, NL - 1)
    lse = jax.nn.logsumexp(lg, axis=-1)
    picked = jnp.take_along_axis(lg, lab_c[:, None], axis=-1)[:, 0]
    loss = jnp.sum((lse - picked) * valid) / jnp.sum(valid)
    return logits, loss


if __name__ == "__main__":
    # Small shapes consistent with the module: batch=2, seq=8, hidden=32,
    # num_labels=5 (token-classification label set).
    B, S, H, NL = 2, 8, 32, 5
    key = jax.random.PRNGKey(0)
    k_x, k_w, k_b, k_l, k_m = jax.random.split(key, 5)

    sequence_output = jax.random.normal(k_x, (B, S, H), dtype=jnp.float32)
    attention_mask = (jax.random.uniform(k_m, (B, S)) > 0.2).astype(jnp.int32)
    attention_mask = attention_mask.at[0, 0].set(1)   # ensure >=1 active token
    labels = jax.random.randint(k_l, (B, S), 0, NL, dtype=jnp.int32)
    # nn.Linear(hidden_size, num_labels) weights, stored transposed as (H, NL).
    w = jax.random.normal(k_w, (H, NL), dtype=jnp.float32) / jnp.sqrt(H)
    b = jax.random.normal(k_b, (NL,), dtype=jnp.float32) * 0.01

    logits, loss = token_classification_decoder_forward(
        sequence_output, attention_mask, labels, w, b)
    logits, loss = jax.block_until_ready((logits, loss))

    ref_logits, ref_loss = _reference(sequence_output, attention_mask, labels, w, b)
    assert logits.shape == (B, S, NL)
    assert jnp.allclose(logits, ref_logits, atol=2e-5, rtol=2e-5)
    assert jnp.allclose(loss, ref_loss, atol=2e-5, rtol=2e-5)

    # labels=None path (logits-only kernel, loss must be None).
    logits_nl, loss_nl = token_classification_decoder_forward(
        sequence_output, attention_mask, None, w, b)
    logits_nl = jax.block_until_ready(logits_nl)
    assert loss_nl is None
    assert jnp.allclose(logits_nl, ref_logits, atol=2e-5, rtol=2e-5)

    # Tail-masking path: force a small row tile so M = 2*13 = 26 is NOT a
    # multiple of the tile and the last tile reads past the array; the
    # in-kernel row mask must keep logits and loss exact.
    B2, S2 = 2, 13
    k2x, k2m, k2l, _ = jax.random.split(jax.random.PRNGKey(1), 4)
    seq2 = jax.random.normal(k2x, (B2, S2, H), dtype=jnp.float32)
    mask2 = (jax.random.uniform(k2m, (B2, S2)) > 0.3).astype(jnp.int32)
    mask2 = mask2.at[0, 0].set(1)
    lab2 = jax.random.randint(k2l, (B2, S2), 0, NL, dtype=jnp.int32)
    logits2, loss2 = token_classification_decoder_forward(
        seq2, mask2, lab2, w, b, tile_rows=8)
    logits2, loss2 = jax.block_until_ready((logits2, loss2))
    ref_logits2, ref_loss2 = _reference(seq2, mask2, lab2, w, b)
    assert jnp.allclose(logits2, ref_logits2, atol=2e-5, rtol=2e-5)
    assert jnp.allclose(loss2, ref_loss2, atol=2e-5, rtol=2e-5)

    print("KERNEL_OK")
</pallas_src>

<mosaic_0001>
module attributes {stable_mosaic.version = 11 : i64} {
  func.func @kernel(%arg0: i32, %arg1: memref<16x32xf32, #tpu.memory_space<vmem>>, %arg2: memref<32x5xf32, #tpu.memory_space<vmem>>, %arg3: memref<1x5xf32, #tpu.memory_space<vmem>>, %arg4: memref<16x1xi32, #tpu.memory_space<vmem>>, %arg5: memref<16x5xf32, #tpu.memory_space<vmem>>, %arg6: memref<8x128xf32, #tpu.memory_space<vmem>>) attributes {dimension_semantics = [#tpu.dimension_semantics<parallel>], iteration_bounds = array<i64: 1>, scalar_prefetch = 0 : i64, scratch_operands = 0 : i64, tpu.core_type = #tpu.core_type<tc>, window_params = [{transform_indices = @transform_0, window_bounds = array<i64: 16, 32>}, {pipeline_mode = #tpu.pipeline_mode<synchronous>, transform_indices = @transform_1, window_bounds = array<i64: 32, 5>}, {pipeline_mode = #tpu.pipeline_mode<synchronous>, transform_indices = @transform_2, window_bounds = array<i64: 1, 5>}, {transform_indices = @transform_3, window_bounds = array<i64: 16, 1>}, {transform_indices = @transform_4, window_bounds = array<i64: 16, 5>}, {transform_indices = @transform_5, window_bounds = array<i64: 8, 128>}]} {
    %c0 = arith.constant 0 : index
    %c0_0 = arith.constant 0 : index
    %0 = vector.load %arg1[%c0, %c0_0] : memref<16x32xf32, #tpu.memory_space<vmem>>, vector<16x32xf32>
    %c0_1 = arith.constant 0 : index
    %c0_2 = arith.constant 0 : index
    %1 = vector.load %arg2[%c0_1, %c0_2] : memref<32x5xf32, #tpu.memory_space<vmem>>, vector<32x5xf32>
    %cst = arith.constant dense<0.000000e+00> : vector<16x5xf32>
    %2 = tpu.matmul %0, %1, %cst {dimension_numbers = #tpu.dot_dimension_numbers<[1], [0], [0], [1], [0, 0, 1, 1], [], []>} : vector<16x32xf32>, vector<32x5xf32>, vector<16x5xf32> -> vector<16x5xf32>
    %c0_3 = arith.constant 0 : index
    %c0_4 = arith.constant 0 : index
    %3 = vector.load %arg3[%c0_3, %c0_4] : memref<1x5xf32, #tpu.memory_space<vmem>>, vector<1x5xf32>
    %4 = vector.broadcast %3 : vector<1x5xf32> to vector<16x5xf32>
    %5 = arith.addf %2, %4 : vector<16x5xf32>
    %c0_5 = arith.constant 0 : index
    %c0_6 = arith.constant 0 : index
    %6 = vector.load %arg5[%c0_5, %c0_6] : memref<16x5xf32, #tpu.memory_space<vmem>>, vector<16x5xf32>
    tpu.vector_store %arg5[%c0_5, %c0_6], %5 {strides = array<i32>} : memref<16x5xf32, #tpu.memory_space<vmem>>, vector<16x5xf32>,
    %c0_7 = arith.constant 0 : index
    %c0_8 = arith.constant 0 : index
    %7 = vector.load %arg4[%c0_7, %c0_8] : memref<16x1xi32, #tpu.memory_space<vmem>>, vector<16x1xi32>
    %c16_i32 = arith.constant 16 : i32
    %8 = arith.muli %arg0, %c16_i32 : i32
    %9 = tpu.iota {dimensions = array<i32: 0>} : vector<16x1xi32>
    %10 = vector.broadcast %8 : i32 to vector<16x1xi32>
    %11 = arith.addi %10, %9 : vector<16x1xi32>
    %c16_i32_9 = arith.constant 16 : i32
    %12 = vector.broadcast %c16_i32_9 : i32 to vector<16x1xi32>
    %13 = arith.cmpi slt, %11, %12 : vector<16x1xi32>
    %c0_i32 = arith.constant 0 : i32
    %14 = vector.broadcast %c0_i32 : i32 to vector<16x1xi32>
    %15 = arith.cmpi sge, %7, %14 : vector<16x1xi32>
    %c5_i32 = arith.constant 5 : i32
    %16 = vector.broadcast %c5_i32 : i32 to vector<16x1xi32>
    %17 = arith.cmpi slt, %7, %16 : vector<16x1xi32>
    %18 = arith.andi %15, %17 : vector<16x1xi1>
    %19 = arith.andi %13, %18 : vector<16x1xi1>
    %cst_10 = arith.constant dense<0xFF800000> : vector<16xf32>
    %20 = vector.multi_reduction <maximumf>, %5, %cst_10 [1] : vector<16x5xf32> to vector<16xf32>
    %21 = vector.shape_cast %20 : vector<16xf32> to vector<16x1xf32>
    %22 = vector.broadcast %21 : vector<16x1xf32> to vector<16x5xf32>
    %23 = arith.subf %5, %22 : vector<16x5xf32>
    %24 = math.exp %23 : vector<16x5xf32>
    %cst_11 = arith.constant dense<0.000000e+00> : vector<16xf32>
    %25 = vector.multi_reduction <add>, %24, %cst_11 [1] : vector<16x5xf32> to vector<16xf32>
    %26 = vector.shape_cast %25 : vector<16xf32> to vector<16x1xf32>
    %27 = math.log %26 : vector<16x1xf32>
    %28 = arith.addf %27, %21 : vector<16x1xf32>
    %29 = tpu.iota {dimensions = array<i32: 1>} : vector<16x5xi32>
    %30 = vector.broadcast %7 : vector<16x1xi32> to vector<16x5xi32>
    %31 = arith.cmpi eq, %29, %30 : vector<16x5xi32>
    %cst_12 = arith.constant 0.000000e+00 : f32
    %32 = vector.broadcast %cst_12 : f32 to vector<16x5xf32>
    %33 = arith.select %31, %5, %32 : vector<16x5xi1>, vector<16x5xf32>
    %cst_13 = arith.constant dense<0.000000e+00> : vector<16xf32>
    %34 = vector.multi_reduction <add>, %33, %cst_13 [1] : vector<16x5xf32> to vector<16xf32>
    %35 = vector.shape_cast %34 : vector<16xf32> to vector<16x1xf32>
    %36 = arith.subf %28, %35 : vector<16x1xf32>
    %cst_14 = arith.constant 0.000000e+00 : f32
    %37 = vector.broadcast %cst_14 : f32 to vector<16x1xf32>
    %38 = arith.select %19, %36, %37 : vector<16x1xi1>, vector<16x1xf32>
    %39 = vector.shape_cast %38 : vector<16x1xf32> to vector<1x16x1xf32>
    %cst_15 = arith.constant dense<0.000000e+00> : vector<1xf32>
    %40 = vector.multi_reduction <add>, %39, %cst_15 [1, 2] : vector<1x16x1xf32> to vector<1xf32>
    %41 = vector.shape_cast %40 : vector<1xf32> to vector<1x1x1xf32>
    %42 = vector.extract %41[0, 0, 0] : f32 from vector<1x1x1xf32>
    %43 = arith.extui %19 : vector<16x1xi1> to vector<16x1xi32>
    %44 = arith.sitofp %43 : vector<16x1xi32> to vector<16x1xf32>
    %45 = vector.shape_cast %44 : vector<16x1xf32> to vector<1x16x1xf32>
    %cst_16 = arith.constant dense<0.000000e+00> : vector<1xf32>
    %46 = vector.multi_reduction <add>, %45, %cst_16 [1, 2] : vector<1x16x1xf32> to vector<1xf32>
    %47 = vector.shape_cast %46 : vector<1xf32> to vector<1x1x1xf32>
    %48 = vector.extract %47[0, 0, 0] : f32 from vector<1x1x1xf32>
    %49 = tpu.iota {dimensions = array<i32: 0>} : vector<8x128xi32>
    %50 = tpu.iota {dimensions = array<i32: 1>} : vector<8x128xi32>
    %c0_i32_17 = arith.constant 0 : i32
    %51 = vector.broadcast %c0_i32_17 : i32 to vector<8x128xi32>
    %52 = arith.cmpi eq, %49, %51 : vector<8x128xi32>
    %c0_i32_18 = arith.constant 0 : i32
    %53 = vector.broadcast %c0_i32_18 : i32 to vector<8x128xi32>
    %54 = arith.cmpi eq, %50, %53 : vector<8x128xi32>
    %55 = arith.andi %52, %54 : vector<8x128xi1>
    %c0_i32_19 = arith.constant 0 : i32
    %56 = vector.broadcast %c0_i32_19 : i32 to vector<8x128xi32>
    %57 = arith.cmpi eq, %49, %56 : vector<8x128xi32>
    %c1_i32 = arith.constant 1 : i32
    %58 = vector.broadcast %c1_i32 : i32 to vector<8x128xi32>
    %59 = arith.cmpi eq, %50, %58 : vector<8x128xi32>
    %60 = arith.andi %57, %59 : vector<8x128xi1>
    %cst_20 = arith.constant 0.000000e+00 : f32
    %61 = vector.broadcast %48 : f32 to vector<8x128xf32>
    %62 = vector.broadcast %cst_20 : f32 to vector<8x128xf32>
    %63 = arith.select %60, %61, %62 : vector<8x128xi1>, vector<8x128xf32>
    %64 = vector.broadcast %42 : f32 to vector<8x128xf32>
    %65 = arith.select %55, %64, %63 : vector<8x128xi1>, vector<8x128xf32>
    %c0_21 = arith.constant 0 : index
    %c0_22 = arith.constant 0 : index
    %66 = vector.load %arg6[%c0_21, %c0_22] : memref<8x128xf32, #tpu.memory_space<vmem>>, vector<8x128xf32>
    tpu.vector_store %arg6[%c0_21, %c0_22], %65 {strides = array<i32>} : memref<8x128xf32, #tpu.memory_space<vmem>>, vector<8x128xf32>,
    return
  }
  func.func @transform_0(%arg0: i32) -> (i32, i32) {
    %c0_i32 = arith.constant 0 : i32
    %c0_i32_0 = arith.constant 0 : i32
    return %arg0, %c0_i32 : i32, i32
  }
  func.func @transform_1(%arg0: i32) -> (i32, i32) {
    %c0_i32 = arith.constant 0 : i32
    %c0_i32_0 = arith.constant 0 : i32
    %c0_i32_1 = arith.constant 0 : i32
    return %c0_i32, %c0_i32_0 : i32, i32
  }
  func.func @transform_2(%arg0: i32) -> (i32, i32) {
    %c0_i32 = arith.constant 0 : i32
    %c0_i32_0 = arith.constant 0 : i32
    %c0_i32_1 = arith.constant 0 : i32
    return %c0_i32, %c0_i32_0 : i32, i32
  }
  func.func @transform_3(%arg0: i32) -> (i32, i32) {
    %c0_i32 = arith.constant 0 : i32
    %c0_i32_0 = arith.constant 0 : i32
    return %arg0, %c0_i32 : i32, i32
  }
  func.func @transform_4(%arg0: i32) -> (i32, i32) {
    %c0_i32 = arith.constant 0 : i32
    %c0_i32_0 = arith.constant 0 : i32
    return %arg0, %c0_i32 : i32, i32
  }
  func.func @transform_5(%arg0: i32) -> (i32, i32) {
    %c0_i32 = arith.constant 0 : i32
    %c0_i32_0 = arith.constant 0 : i32
    return %arg0, %c0_i32 : i32, i32
  }
}

</mosaic_0001>

<llo_original>
// kernel: _fused_forward.1
$region0: #{_fused_forward.1}
  #allocation0 [shape = 'u32[]', space=smem, size = 0x4, offset = 0x4, fixed_abs, tag = 'smem constant byte address 0x4 - core index']
  #allocation1 [shape = 'u32[144,128]{1,0:T(1,128)}', space=vmem, size = 0x12000, scoped, tag = 'internal scratch']
  %s0 = inlined_call_operand.vmem [shape: f32[16,32], index: 0, kind: input, shape index: {}]
  %s1 = inlined_call_operand.vmem [shape: f32[32,5], index: 1, kind: input, shape index: {}]
  %s2 = inlined_call_operand.vmem [shape: f32[1,5], index: 2, kind: input, shape index: {}]
  %s3 = inlined_call_operand.vmem [shape: s32[16,1], index: 3, kind: input, shape index: {}]
  %s4 = inlined_call_operand.vmem [shape: f32[16,5], index: 4, kind: output, shape index: {0}]
  %s5 = inlined_call_operand.vmem [shape: f32[8,128], index: 5, kind: output, shape index: {1}]
  %6 = xla_tuple %s4, %s5
  %s7 = sld [smem:[#allocation0]]
  $region34: #{_fused_forward.1} parent=0
    _
  %s9 = ssub.s32 1, %s7
  %s10 = scalar_select 0, %s9, %s7
  // Predicated region
  $region2: #{_fused_forward.1} parent=0 // pred_check
    _
  $region3: #{_fused_forward.1} parent=0 // pred_check_branch
    %12 = sbr.rel (0) target = $region5
  $region4: #{_fused_forward.1} parent=0 // pred_region
    _
  $region5: #{_fused_forward.1} parent=0 // pred_fallthru
    _
  // Predicated region
  $region6: #{_fused_forward.1} parent=0 // pred_check
    _
  $region7: #{_fused_forward.1} parent=0 // pred_check_branch
    %14 = sbr.rel (0) target = $region9
  $region8: #{_fused_forward.1} parent=0 // pred_region
    _
  $region9: #{_fused_forward.1} parent=0 // pred_fallthru
    _
  // Predicated region
  $region10: #{_fused_forward.1} parent=0 // pred_check
    _
  $region11: #{_fused_forward.1} parent=0 // pred_check_branch
    %16 = sbr.rel (0) target = $region13
  $region12: #{_fused_forward.1} parent=0 // pred_region
    _
  $region13: #{_fused_forward.1} parent=0 // pred_fallthru
    _
  // Predicated region
  $region14: #{_fused_forward.1} parent=0 // pred_check
    _
  $region15: #{_fused_forward.1} parent=0 // pred_check_branch
    %18 = sbr.rel (0) target = $region17
  $region16: #{_fused_forward.1} parent=0 // pred_region
    _
  $region17: #{_fused_forward.1} parent=0 // pred_fallthru
    _
  %v19 = vld [vmem:[%s0] sm:$0xff]
  %v20 = vld [vmem:[%s0 + $0x8] sm:$0xff]
  %v21 = vld [vmem:[%s1] sm:$0xff]
  %v22 = vld [vmem:[%s1 + $0x8] sm:$0xff]
  %v23 = vld [vmem:[%s1 + $0x10] sm:$0xff]
  %v24 = vld [vmem:[%s1 + $0x18] sm:$0xff]
  %v25 = vld [vmem:[%s2] sm:$0x1]
  %v27 = vlaneseq
  %v28 = vshrl.u32 %v27, 7
  %v29 = vsub.s32 0, %v28
  %v30 = vrot.slane %v25, %v29
  %vm32 = vcmask 261120
  %v34 = vsel %vm32, %v19, 0
  %v37 = vsel %vm32, %v20, 0
  %39 = vmatprep.subr.mxu0 0.0
  %40 = vmatpush1.msra.mxu0 %v21
  %41 = vmatprep.subr.mxu0 0.0
  %42 = vmatpush1.msra.mxu0 %v22
  %43 = vmatprep.subr.mxu0 0.0
  %44 = vmatpush1.msra.mxu0 %v23
  %45 = vmatprep.subr.mxu0 0.0
  %46 = vmatpush1.msra.mxu0 %v24
  %47 = vmatprep.subr.mxu0 0.0
  %48 = vmatpush1.msra.mxu0 0.0
  %49 = vmatprep.subr.mxu0 0.0
  %50 = vmatpush1.msra.mxu0 0.0
  %51 = vmatprep.subr.mxu0 0.0
  %52 = vmatpush1.msra.mxu0 0.0
  %53 = vmatprep.subr.mxu0 0.0
  %54 = vmatpush1.msra.mxu0 0.0
  %55 = vmatprep.subr.mxu0 0.0
  %56 = vmatpush1.msra.mxu0 0.0
  %57 = vmatprep.subr.mxu0 0.0
  %58 = vmatpush1.msra.mxu0 0.0
  %59 = vmatprep.subr.mxu0 0.0
  %60 = vmatpush1.msra.mxu0 0.0
  %61 = vmatprep.subr.mxu0 0.0
  %62 = vmatpush1.msra.mxu0 0.0
  %63 = vmatprep.subr.mxu0 0.0
  %64 = vmatpush1.msra.mxu0 0.0
  %65 = vmatprep.subr.mxu0 0.0
  %66 = vmatpush1.msra.mxu0 0.0
  %67 = vmatprep.subr.mxu0 0.0
  %68 = vmatpush1.msra.mxu0 0.0
  %69 = vmatprep.subr.mxu0 0.0
  %70 = vmatpush1.msra.mxu0 0.0
  %71 = vmatprep.subr.mxu0 0.0
  %72 = vmatpush1.msra.mxu0 0.0
  %73 = vmatprep.subr.mxu0 0.0
  %74 = vmatpush1.msra.mxu0 0.0
  %75 = vmatprep.subr.mxu0 0.0
  %76 = vmatpush1.msra.mxu0 0.0
  %77 = vmatprep.subr.mxu0 0.0
  %78 = vmatpush1.msra.mxu0 0.0
  %79 = vmatprep.subr.mxu0 0.0
  %80 = vmatpush1.msra.mxu0 0.0
  %81 = vmatprep.subr.mxu0 0.0
  %82 = vmatpush1.msra.mxu0 0.0
  %83 = vmatprep.subr.mxu0 0.0
  %84 = vmatpush1.msra.mxu0 0.0
  %85 = vmatprep.subr.mxu0 0.0
  %86 = vmatpush1.msra.mxu0 0.0
  %87 = vmatprep.subr.mxu0 0.0
  %88 = vmatpush1.msra.mxu0 0.0
  %89 = vmatprep.subr.mxu0 0.0
  %90 = vmatpush1.msra.mxu0 0.0
  %91 = vmatprep.subr.mxu0 0.0
  %92 = vmatpush1.msra.mxu0 0.0
  %93 = vmatprep.subr.mxu0 0.0
  %94 = vmatpush1.msra.mxu0 0.0
  %95 = vmatprep.subr.mxu0 0.0
  %96 = vmatpush1.msra.mxu0 0.0
  %97 = vmatprep.subr.mxu0 0.0
  %98 = vmatpush1.msra.mxu0 0.0
  %99 = vmatprep.subr.mxu0 0.0
  %100 = vmatpush1.msra.mxu0 0.0
  %101 = vmatprep.subr.mxu0 0.0
  %102 = vmatpush1.msra.mxu0 0.0
  %103 = vmatprep.mubr.f32.mxu0 0.0
  %104 = vmatmul.mubr.f32.gmra.mrb[0].mxu0 %v34
  %v105 = vpop.f32.mrb[0].mxu0
  %v106 = vadd.f32 %v30, %v105
  %v107 = vpop.f32.mrb[0].mxu0
  %108 = vmatprep.mubr.f32.mxu0 0.0
  %109 = vmatmul.mubr.f32.gmra.mrb[0].mxu0 %v37
  %v110 = vpop.f32.mrb[0].mxu0
  %v111 = vadd.f32 %v30, %v110
  %v112 = vpop.f32.mrb[0].mxu0
  %113 = vdwg.mxu0
  %vm114 = vcmask 39936
  %115 = vst.msk [vmem:[%s4] sm:$0xff] %vm114, %v106
  %116 = vst.msk [vmem:[%s4 + $0x8] sm:$0xff] %vm114, %v111
  %v117 = vld [vmem:[%s3] sm:$0xff]
  %v118 = vld [vmem:[%s3 + $0x8] sm:$0xff]
  %s119 = smul.u32 0, 16
  %v120 = vlaneseq
  %v121 = vshrl.u32 %v120, 7
  %v122 = vadd.s32 %v121, 8
  %v123 = vstv %s119
  %v124 = vadd.s32 %v123, %v121
  %v125 = vadd.s32 %v123, %v122
  %vm126 = vcmp.lt.s32.totalorder %v124, 16
  %vm127 = vcmp.lt.s32.totalorder %v125, 16
  %vm128 = vcmp.ge.s32.totalorder %v117, 0
  %vm129 = vcmp.ge.s32.totalorder %v118, 0
  %vm130 = vcmp.lt.s32.totalorder %v117, 5
  %vm131 = vcmp.lt.s32.totalorder %v118, 5
  %vm132 = vmand %vm128, %vm130
  %vm133 = vmand %vm129, %vm131
  %vm134 = vmand %vm126, %vm132
  %vm135 = vmand %vm127, %vm133
  %v136 = vsel %vm114, %v106, -inf
  %137 = vmax.xlane.f32.xlu0 %v136
  %v138 = vpop.xlane.xlu0 %137
  %v139 = vsel %vm114, %v111, -inf
  %140 = vmax.xlane.f32.xlu0 %v139
  %v141 = vpop.xlane.xlu0 %140
  %v142 = vsub.f32 %v106, %v138
  %v143 = vsub.f32 %v111, %v141
  %v144 = vmul.f32 %v142, 1.442695
  %v145 = vpow.pop %v144
  %v146 = vmul.f32 %v143, 1.442695
  %v147 = vpow.pop %v146
  %v148 = vsel %vm114, %v145, 0.0
  %149 = vadd.xlane.f32.xlu0 %v148
  %v150 = vpop.xlane.xlu0 %149
  %v151 = vsel %vm114, %v147, 0.0
  %152 = vadd.xlane.f32.xlu0 %v151
  %v153 = vpop.xlane.xlu0 %152
  %v154 = vlog2.pop %v150
  %v155 = vmul.f32 %v154, 0.6931472
  %v156 = vlog2.pop %v153
  %v157 = vmul.f32 %v156, 0.6931472
  %v158 = vadd.f32 %v155, %v138
  %v159 = vadd.f32 %v157, %v141
  %v160 = vlaneseq
  %v161 = vand.u32 %v160, 127
  %162 = vset.pattern.permute.xlu0 0
  %163 = vperm.xlu0 %162, %v117
  %v164 = vpop.permute.xlu0 %163
  %165 = vset.pattern.permute.xlu0 0
  %166 = vperm.xlu0 %165, %v118
  %v167 = vpop.permute.xlu0 %166
  %vm168 = vcmp.eq.s32.totalorder %v161, %v164
  %vm169 = vcmp.eq.s32.totalorder %v161, %v167
  %v170 = vsel %vm168, %v106, 0.0
  %v171 = vsel %vm169, %v111, 0.0
  %v172 = vsel %vm114, %v170, 0.0
  %173 = vadd.xlane.f32.xlu0 %v172
  %v174 = vpop.xlane.xlu0 %173
  %v175 = vsel %vm114, %v171, 0.0
  %176 = vadd.xlane.f32.xlu0 %v175
  %v177 = vpop.xlane.xlu0 %176
  %v178 = vsub.f32 %v158, %v174
  %v179 = vsub.f32 %v159, %v177
  %v180 = vsel %vm134, %v178, 0.0
  %v181 = vsel %vm135, %v179, 0.0
  %vm182 = vcmask 7168
  %v183 = vsel %vm182, %v180, 0.0
  %v184 = vsel %vm182, %v181, 0.0
  %v185 = vadd.f32 %v183, %v184
  %186 = vadd.xlane.f32.xlu0 %v185
  %v187 = vpop.xlane.xlu0 %186
  %v188 = vrot.slane %v187, 4
  %v189 = vadd.f32 %v187, %v188
  %v190 = vrot.slane %v189, 2
  %v191 = vadd.f32 %v189, %v190
  %v192 = vrot.slane %v191, 1
  %v193 = vadd.f32 %v191, %v192
  %s194 = vtos %v193
  %v195 = vsel %vm134, 1, 0
  %v196 = vsel %vm135, 1, 0
  %v197 = vcvt.s32.f32 %v195
  %v198 = vcvt.s32.f32 %v196
  %v199 = vsel %vm182, %v197, 0.0
  %v200 = vsel %vm182, %v198, 0.0
  %v201 = vadd.f32 %v199, %v200
  %202 = vadd.xlane.f32.xlu0 %v201
  %v203 = vpop.xlane.xlu0 %202
  %v204 = vrot.slane %v203, 4
  %v205 = vadd.f32 %v203, %v204
  %v206 = vrot.slane %v205, 2
  %v207 = vadd.f32 %v205, %v206
  %v208 = vrot.slane %v207, 1
  %v209 = vadd.f32 %v207, %v208
  %s210 = vtos %v209
  %vm211 = vcmp.eq.s32.totalorder %v121, 0
  %vm212 = vcmp.eq.s32.totalorder %v161, 0
  %vm213 = vmand %vm211, %vm212
  %vm214 = vcmp.eq.s32.totalorder %v161, 1
  %vm215 = vmand %vm211, %vm214
  %v216 = vstv %s210
  %v217 = vsel %vm215, %v216, 0.0
  %v218 = vstv %s194
  %v219 = vsel %vm213, %v218, %v217
  %220 = vst [vmem:[%s5] sm:$0xff] %v219
  // Predicated region
  $region18: #{_fused_forward.1} parent=0 // pred_check
    _
  $region19: #{_fused_forward.1} parent=0 // pred_check_branch
    %222 = sbr.rel (0) target = $region21
  $region20: #{_fused_forward.1} parent=0 // pred_region
    _
  $region21: #{_fused_forward.1} parent=0 // pred_fallthru
    _
  // Predicated region
  $region22: #{_fused_forward.1} parent=0 // pred_check
    _
  $region23: #{_fused_forward.1} parent=0 // pred_check_branch
    %224 = sbr.rel (0) target = $region25
  $region24: #{_fused_forward.1} parent=0 // pred_region
    _
  $region25: #{_fused_forward.1} parent=0 // pred_fallthru
    _
  // Predicated region
  $region26: #{_fused_forward.1} parent=0 // pred_check
    _
  $region27: #{_fused_forward.1} parent=0 // pred_check_branch
    %226 = sbr.rel (0) target = $region29
  $region28: #{_fused_forward.1} parent=0 // pred_region
    _
  $region29: #{_fused_forward.1} parent=0 // pred_fallthru
    _
  // Predicated region
  $region30: #{_fused_forward.1} parent=0 // pred_check
    _
  $region31: #{_fused_forward.1} parent=0 // pred_check_branch
    %228 = sbr.rel (0) target = $region33
  $region32: #{_fused_forward.1} parent=0 // pred_region
    _
  $region33: #{_fused_forward.1} parent=0 // pred_fallthru
    _

</llo_original>
